<compile_context>
chip_gen: v7x
topology: tpu7x:2x2x1
jax: 0.10.0
libtpu: 0.0.40
codegen_flags: <defaults>
</compile_context>

<pallas_src>
import jax
import jax.numpy as jnp
from jax.experimental import pallas as pl
from jax.experimental.pallas import tpu as pltpu


# ----------------------------------------------------------------------------
# Plain-JAX glue: bilinear corner gather (data-dependent gather) + point
# sampling logic (random oversampling, uncertainty, top-k).
# ----------------------------------------------------------------------------
def _bilinear_corners_t(img, points, out_dtype=None):
    """Corners + weights for F.grid_sample(mode='bilinear', align_corners=False,
    padding_mode='zeros') at normalized points in [0, 1].

    NOTE: points use the [0, 1] convention of PointRend's point_sample wrapper.

    img:    [B, C, H, W]
    points: [B, N, 2] with points[..., 0] = x (width), points[..., 1] = y (height)
    returns corners [B, 4, C, N] (corner leading, N on lanes), weights [B, 4, 1, N]
    """
    B, C, H, W = img.shape
    x = points[..., 0] * W - 0.5
    y = points[..., 1] * H - 0.5
    x0 = jnp.floor(x)
    y0 = jnp.floor(y)
    x1 = x0 + 1.0
    y1 = y0 + 1.0
    wx1 = x - x0
    wx0 = 1.0 - wx1
    wy1 = y - y0
    wy0 = 1.0 - wy1

    def inb(xx, yy):  # zero-padding: out-of-bounds corners contribute 0
        return ((xx >= 0) & (xx <= W - 1) & (yy >= 0) & (yy <= H - 1)).astype(points.dtype)

    weights = jnp.stack(
        [wy0 * wx0 * inb(x0, y0),
         wy0 * wx1 * inb(x1, y0),
         wy1 * wx0 * inb(x0, y1),
         wy1 * wx1 * inb(x1, y1)],
        axis=1)                                                    # [B, 4, N]

    xs = jnp.clip(jnp.stack([x0, x1, x0, x1], axis=1), 0, W - 1).astype(jnp.int32)
    ys = jnp.clip(jnp.stack([y0, y0, y1, y1], axis=1), 0, H - 1).astype(jnp.int32)
    lin = ys * W + xs                                              # [B, 4, N]
    flat = img.reshape(B, C, H * W)

    # Gather directly into [B, 4, C, N] (no XLA transpose pass over the largest
    # intermediate): vmap the row-gather over the corner axis, then over batch.
    gather_rows = lambda f, l: f[:, l]                             # [C,HW],[N] -> [C,N]
    per_corner = jax.vmap(gather_rows, in_axes=(None, 0))          # [C,HW],[4,N] -> [4,C,N]
    corners = jax.vmap(per_corner)(flat, lin)                      # [B, 4, C, N]

    if out_dtype is not None:
        corners = corners.astype(out_dtype)
        weights = weights.astype(out_dtype)
    return corners, weights[:, :, None, :]                         # [B, 4, 1, N]


def _point_sample_ref(img, points):
    """Pure-JAX point_sample (uncertainty path + correctness reference). -> [B, C, N]"""
    corners, weights = _bilinear_corners_t(img, points)
    return jnp.sum(corners * weights, axis=1)


def sampling_points(out, N, k, beta, key):
    """Training-mode PointRend importance sampling -> points [B, N, 2]."""
    B = out.shape[0]
    k_rand, k_cov = jax.random.split(key)
    sorted_out = -jnp.sort(-out, axis=1)                           # descending over channels
    over_gen = jax.random.uniform(k_rand, (B, k * N, 2), dtype=out.dtype)
    og_map = _point_sample_ref(sorted_out, over_gen)               # [B, C, k*N]
    uncertainty = -(og_map[:, 0] - og_map[:, 1])                   # [B, k*N]
    n_imp = int(beta * N)
    _, idx = jax.lax.top_k(uncertainty, n_imp)                     # [B, n_imp]
    importance = jnp.take_along_axis(over_gen, idx[:, :, None], axis=1)
    coverage = jax.random.uniform(k_cov, (B, N - n_imp, 2), dtype=out.dtype)
    return jnp.concatenate([importance, coverage], axis=1)         # [B, N, 2]


# ----------------------------------------------------------------------------
# Pallas kernel: fused bilinear combine (coarse + fine point_sample) and the
# 1x1 Conv1d (split channel matmul) + bias, emitting [nc, N_tile] directly.
# ----------------------------------------------------------------------------
def _pointhead_kernel(co_ref, wo_ref, cf_ref, wf_ref, wc_ref, wfm_ref, bias_ref, o_ref):
    # co_ref: [1, 4, C_out, Nt]   wo_ref: [1, 4, 1, Nt]   (bf16)
    # cf_ref: [1, 4, C_res2, Nt]  wf_ref: [1, 4, 1, Nt]   (bf16)
    # wc_ref: [nc, C_out]  wfm_ref: [nc, C_res2] (bf16)   bias_ref: [nc, 1] (f32)
    f32 = jnp.float32
    c_out, nt = co_ref.shape[2], co_ref.shape[3]
    c_fine = cf_ref.shape[2]

    # 4-corner bilinear combine in f32 on the VPU (safe on v5e; memory-bound
    # elsewhere so the extra VALU width is free), unrolled static slices.
    coarse = jnp.zeros((c_out, nt), f32)
    fine = jnp.zeros((c_fine, nt), f32)
    for c in range(4):
        coarse = coarse + co_ref[0, c].astype(f32) * wo_ref[0, c].astype(f32)
        fine = fine + cf_ref[0, c].astype(f32) * wf_ref[0, c].astype(f32)

    # cat([coarse, fine], channel) then Conv1d  ==  Wc @ coarse + Wf @ fine (exact).
    # bf16 MXU operands, f32 accumulation via preferred_element_type.
    mm_dt = wc_ref.dtype
    rend = (jnp.dot(wc_ref[...], coarse.astype(mm_dt), preferred_element_type=jnp.float32)
            + jnp.dot(wfm_ref[...], fine.astype(mm_dt), preferred_element_type=jnp.float32)
            + bias_ref[...].astype(f32))                           # [nc, Nt]
    o_ref[0] = rend.astype(o_ref.dtype)


# ----------------------------------------------------------------------------
# VMEM accounting + generation-aware tile selection.
# ----------------------------------------------------------------------------
def _pad8(c):
    return -(-c // 8) * 8


def _tile_footprint_bytes(nt, c_out, c_fine, nc, in_isz, out_isz):
    """Per-grid-step VMEM estimate: double-buffered input tiles, double-buffered
    output tile, resident weight/bias tiles, and the un-buffered f32
    coarse/fine/rend intermediates (sublane-padded to 8)."""
    dbl_in = 2 * 4 * (_pad8(c_out) + _pad8(c_fine) + 2 * _pad8(1)) * nt * in_isz
    weights = 2 * (_pad8(nc) * (c_out + c_fine) * in_isz + _pad8(nc) * 128 * 4)
    f32_tmp = (_pad8(c_out) + _pad8(c_fine) + _pad8(nc)) * nt * 4
    dbl_out = 2 * _pad8(nc) * nt * out_isz
    return dbl_in + weights + f32_tmp + dbl_out


def _vmem_budget_and_limit():
    """Tile budget = half of physical VMEM (64 MiB on v5e/v6e, 32 MiB on v7x);
    scoped vmem_limit_bytes = 3/4 of physical so every generation keeps real
    headroom instead of the 16/32 MiB default scoped limits."""
    try:
        cap = int(getattr(pltpu.get_tpu_info(), "vmem_capacity_bytes", 64 << 20))
    except Exception:
        cap = 64 << 20  # conservative fallback (v7x per-TensorCore VMEM)
    return cap // 2, (cap // 4) * 3


def _choose_n_tile(N, c_out, c_fine, nc, in_isz, out_isz, batch, budget):
    """Largest point-tile (multiple of 128 dividing the padded N) whose footprint
    fits the budget; for tiny grids prefer an even total tile count so v7x's two
    TensorCores both get work."""
    cands = [c for c in (128, 256, 512, 1024, 2048, 4096) if c <= N and N % c == 0]
    if not cands:
        cands = [N]
    best = cands[0]
    for c in cands:
        if _tile_footprint_bytes(c, c_out, c_fine, nc, in_isz, out_isz) <= budget:
            best = c
    total = batch * (N // best)
    if total % 2 == 1 and total < 8 and best >= 256 and N % (best // 2) == 0:
        best //= 2
    return best


def pointhead_mlp_pallas(co, wo, cf, wf, wc_t, wf_t, bias, out_dtype):
    B, _, c_out, N = co.shape
    c_fine = cf.shape[2]
    nc = wc_t.shape[0]

    # Pad the point axis to a multiple of 128 so it can always be lane-tiled
    # (padded columns carry zero bilinear weights; their output is sliced off).
    n_pad = (-N) % 128
    if n_pad:
        pad = ((0, 0), (0, 0), (0, 0), (0, n_pad))
        co, wo, cf, wf = [jnp.pad(a, pad) for a in (co, wo, cf, wf)]
    Np = N + n_pad

    budget, vmem_limit = _vmem_budget_and_limit()
    nt = _choose_n_tile(Np, c_out, c_fine, nc,
                        jnp.dtype(co.dtype).itemsize, jnp.dtype(out_dtype).itemsize,
                        B, budget)
    grid = (B, Np // nt)

    rend = pl.pallas_call(
        _pointhead_kernel,
        out_shape=jax.ShapeDtypeStruct((B, nc, Np), out_dtype),
        grid=grid,
        in_specs=[
            pl.BlockSpec((1, 4, c_out, nt), lambda b, n: (b, 0, 0, n)),
            pl.BlockSpec((1, 4, 1, nt), lambda b, n: (b, 0, 0, n)),
            pl.BlockSpec((1, 4, c_fine, nt), lambda b, n: (b, 0, 0, n)),
            pl.BlockSpec((1, 4, 1, nt), lambda b, n: (b, 0, 0, n)),
            pl.BlockSpec((nc, c_out), lambda b, n: (0, 0)),
            pl.BlockSpec((nc, c_fine), lambda b, n: (0, 0)),
            pl.BlockSpec((nc, 1), lambda b, n: (0, 0)),
        ],
        out_specs=pl.BlockSpec((1, nc, nt), lambda b, n: (b, 0, n)),
        compiler_params=pltpu.CompilerParams(
            dimension_semantics=("parallel", "parallel"),
            vmem_limit_bytes=int(vmem_limit)),
    )(co, wo, cf, wf, wc_t, wf_t, bias)
    return rend[..., :N] if n_pad else rend


# ----------------------------------------------------------------------------
# Module wrapper (training-mode forward of PointHead).
# ----------------------------------------------------------------------------
class PointHeadPallas:
    def __init__(self, in_c=532, num_classes=21, k=3, beta=0.75):
        self.in_c = in_c
        self.num_classes = num_classes
        self.k = k
        self.beta = beta
        # Deterministic Conv1d(in_c, num_classes, 1) params, torch layout [nc, in_c].
        wkey = jax.random.PRNGKey(42)
        kw, kb = jax.random.split(wkey)
        bound = 1.0 / (in_c ** 0.5)
        self.weight = jax.random.uniform(kw, (num_classes, in_c), jnp.float32, -bound, bound)
        self.bias = jax.random.uniform(kb, (num_classes, 1), jnp.float32, -bound, bound)
        # bf16 copy for the MXU (memory-bound kernel: halve operand bytes).
        self.weight_bf16 = self.weight.astype(jnp.bfloat16)

    def __call__(self, x, res2, out, key):
        # training branch of PointHead.forward
        N = x.shape[-1] // 8
        points = sampling_points(out, N, self.k, self.beta, key)          # [B, N, 2]
        # Corners emitted directly in [B, 4, C, N] (no transpose) and in bf16.
        co, wo = _bilinear_corners_t(out, points, out_dtype=jnp.bfloat16)
        cf, wf = _bilinear_corners_t(res2, points, out_dtype=jnp.bfloat16)
        # TODO(synk): fuse the res2 corner gather fully into the kernel (res2
        # resident in VMEM + SMEM-prefetched linear indices / DMA row gather)
        # once Mosaic's dynamic-gather supports large sublane extents.
        c_out = co.shape[2]
        assert c_out + cf.shape[2] == self.in_c
        wc_t = self.weight_bf16[:, :c_out]                                # [nc, C_out]
        wf_t = self.weight_bf16[:, c_out:]                                # [nc, C_res2]
        rend = pointhead_mlp_pallas(co, wo, cf, wf, wc_t, wf_t, self.bias,
                                    out_dtype=out.dtype)                  # [B, nc, N]
        return {"rend": rend, "points": points}

    # TODO(synk): inference() iterative subdivision (F.interpolate x2 loop +
    # in-place scatter_ into the upsampled logits) is not implemented here.


if __name__ == "__main__":
    key = jax.random.PRNGKey(0)
    k_x, k_r, k_o, k_pts = jax.random.split(key, 4)

    # Small shapes consistent with the module: num_classes + res2_channels = in_c.
    # Only x.shape[-1] matters for N; last dim 2048 -> N = 256 sampled points.
    B = 2
    num_classes = 4
    res2_c = 12
    in_c = num_classes + res2_c
    x = jax.random.normal(k_x, (B, 3, 16, 2048), jnp.float32)     # input image (only shape used)
    res2 = jax.random.normal(k_r, (B, res2_c, 16, 16), jnp.float32)
    out = jax.random.normal(k_o, (B, num_classes, 8, 8), jnp.float32)

    head = PointHeadPallas(in_c=in_c, num_classes=num_classes, k=3, beta=0.75)
    result = head(x, res2, out, key=k_pts)
    jax.block_until_ready(result["rend"])

    N = x.shape[-1] // 8
    assert result["rend"].shape == (B, num_classes, N)
    assert result["points"].shape == (B, N, 2)

    # Precision-matched reference (same bf16 quantization the kernel sees):
    # point_sample + concat + Conv1d with bf16 features/weights, f32 accumulation.
    points = result["points"]
    co_b, wo_b = _bilinear_corners_t(out, points, out_dtype=jnp.bfloat16)
    cf_b, wf_b = _bilinear_corners_t(res2, points, out_dtype=jnp.bfloat16)
    coarse_ref = jnp.sum(co_b.astype(jnp.float32) * wo_b.astype(jnp.float32), axis=1)
    fine_ref = jnp.sum(cf_b.astype(jnp.float32) * wf_b.astype(jnp.float32), axis=1)
    feat = jnp.concatenate([coarse_ref, fine_ref], axis=1).astype(jnp.bfloat16)
    rend_ref = (jnp.einsum("bcn,kc->bkn", feat, head.weight_bf16,
                           preferred_element_type=jnp.float32)
                + head.bias[None]).astype(out.dtype)
    assert jnp.allclose(result["rend"], rend_ref, atol=1e-2, rtol=1e-2)

    # Loose semantic guard against the pure-f32 PointRend math (only bf16
    # rounding of corners/weights separates the two).
    coarse_f = _point_sample_ref(out, points)
    fine_f = _point_sample_ref(res2, points)
    feat_f = jnp.concatenate([coarse_f, fine_f], axis=1)
    rend_f = jnp.einsum("bcn,kc->bkn", feat_f, head.weight) + head.bias[None]
    assert float(jnp.max(jnp.abs(result["rend"] - rend_f))) < 0.25

    print("KERNEL_OK")
</pallas_src>

<mosaic_0001>
module attributes {stable_mosaic.version = 11 : i64} {
  func.func @_pointhead_kernel(%arg0: i32, %arg1: i32, %arg2: memref<1x4x4x256xbf16, #tpu.memory_space<vmem>>, %arg3: memref<1x4x1x256xbf16, #tpu.memory_space<vmem>>, %arg4: memref<1x4x12x256xbf16, #tpu.memory_space<vmem>>, %arg5: memref<1x4x1x256xbf16, #tpu.memory_space<vmem>>, %arg6: memref<4x4xbf16, #tpu.memory_space<vmem>>, %arg7: memref<4x12xbf16, #tpu.memory_space<vmem>>, %arg8: memref<4x1xf32, #tpu.memory_space<vmem>>, %arg9: memref<1x4x256xf32, #tpu.memory_space<vmem>>) attributes {dimension_semantics = [#tpu.dimension_semantics<parallel>, #tpu.dimension_semantics<parallel>], iteration_bounds = array<i64: 2, 1>, scalar_prefetch = 0 : i64, scratch_operands = 0 : i64, tpu.core_type = #tpu.core_type<tc>, window_params = [{transform_indices = @transform_0, window_bounds = array<i64: 1, 4, 4, 256>}, {transform_indices = @transform_1, window_bounds = array<i64: 1, 4, 1, 256>}, {transform_indices = @transform_2, window_bounds = array<i64: 1, 4, 12, 256>}, {transform_indices = @transform_3, window_bounds = array<i64: 1, 4, 1, 256>}, {pipeline_mode = #tpu.pipeline_mode<synchronous>, transform_indices = @transform_4, window_bounds = array<i64: 4, 4>}, {pipeline_mode = #tpu.pipeline_mode<synchronous>, transform_indices = @transform_5, window_bounds = array<i64: 4, 12>}, {pipeline_mode = #tpu.pipeline_mode<synchronous>, transform_indices = @transform_6, window_bounds = array<i64: 4, 1>}, {transform_indices = @transform_7, window_bounds = array<i64: 1, 4, 256>}]} {
    %cst = arith.constant 0.000000e+00 : f32
    %0 = vector.broadcast %cst : f32 to vector<4x256xf32>
    %cst_0 = arith.constant 0.000000e+00 : f32
    %1 = vector.broadcast %cst_0 : f32 to vector<12x256xf32>
    %c0 = arith.constant 0 : index
    %c0_1 = arith.constant 0 : index
    %c0_2 = arith.constant 0 : index
    %c0_3 = arith.constant 0 : index
    %2 = vector.load %arg2[%c0, %c0_1, %c0_2, %c0_3] : memref<1x4x4x256xbf16, #tpu.memory_space<vmem>>, vector<1x1x4x256xbf16>
    %3 = vector.shape_cast %2 : vector<1x1x4x256xbf16> to vector<4x256xbf16>
    %4 = arith.extf %3 : vector<4x256xbf16> to vector<4x256xf32>
    %c0_4 = arith.constant 0 : index
    %c0_5 = arith.constant 0 : index
    %c0_6 = arith.constant 0 : index
    %c0_7 = arith.constant 0 : index
    %5 = vector.load %arg3[%c0_4, %c0_5, %c0_6, %c0_7] : memref<1x4x1x256xbf16, #tpu.memory_space<vmem>>, vector<1x1x1x256xbf16>
    %6 = vector.shape_cast %5 : vector<1x1x1x256xbf16> to vector<1x256xbf16>
    %7 = arith.extf %6 : vector<1x256xbf16> to vector<1x256xf32>
    %8 = vector.broadcast %7 : vector<1x256xf32> to vector<4x256xf32>
    %9 = arith.mulf %4, %8 : vector<4x256xf32>
    %10 = arith.addf %0, %9 : vector<4x256xf32>
    %c0_8 = arith.constant 0 : index
    %c0_9 = arith.constant 0 : index
    %c0_10 = arith.constant 0 : index
    %c0_11 = arith.constant 0 : index
    %11 = vector.load %arg4[%c0_8, %c0_9, %c0_10, %c0_11] : memref<1x4x12x256xbf16, #tpu.memory_space<vmem>>, vector<1x1x12x256xbf16>
    %12 = vector.shape_cast %11 : vector<1x1x12x256xbf16> to vector<12x256xbf16>
    %13 = arith.extf %12 : vector<12x256xbf16> to vector<12x256xf32>
    %c0_12 = arith.constant 0 : index
    %c0_13 = arith.constant 0 : index
    %c0_14 = arith.constant 0 : index
    %c0_15 = arith.constant 0 : index
    %14 = vector.load %arg5[%c0_12, %c0_13, %c0_14, %c0_15] : memref<1x4x1x256xbf16, #tpu.memory_space<vmem>>, vector<1x1x1x256xbf16>
    %15 = vector.shape_cast %14 : vector<1x1x1x256xbf16> to vector<1x256xbf16>
    %16 = arith.extf %15 : vector<1x256xbf16> to vector<1x256xf32>
    %17 = vector.broadcast %16 : vector<1x256xf32> to vector<12x256xf32>
    %18 = arith.mulf %13, %17 : vector<12x256xf32>
    %19 = arith.addf %1, %18 : vector<12x256xf32>
    %c0_16 = arith.constant 0 : index
    %c1 = arith.constant 1 : index
    %c0_17 = arith.constant 0 : index
    %c0_18 = arith.constant 0 : index
    %20 = vector.load %arg2[%c0_16, %c1, %c0_17, %c0_18] : memref<1x4x4x256xbf16, #tpu.memory_space<vmem>>, vector<1x1x4x256xbf16>
    %21 = vector.shape_cast %20 : vector<1x1x4x256xbf16> to vector<4x256xbf16>
    %22 = arith.extf %21 : vector<4x256xbf16> to vector<4x256xf32>
    %c0_19 = arith.constant 0 : index
    %c1_20 = arith.constant 1 : index
    %c0_21 = arith.constant 0 : index
    %c0_22 = arith.constant 0 : index
    %23 = vector.load %arg3[%c0_19, %c1_20, %c0_21, %c0_22] : memref<1x4x1x256xbf16, #tpu.memory_space<vmem>>, vector<1x1x1x256xbf16>
    %24 = vector.shape_cast %23 : vector<1x1x1x256xbf16> to vector<1x256xbf16>
    %25 = arith.extf %24 : vector<1x256xbf16> to vector<1x256xf32>
    %26 = vector.broadcast %25 : vector<1x256xf32> to vector<4x256xf32>
    %27 = arith.mulf %22, %26 : vector<4x256xf32>
    %28 = arith.addf %10, %27 : vector<4x256xf32>
    %c0_23 = arith.constant 0 : index
    %c1_24 = arith.constant 1 : index
    %c0_25 = arith.constant 0 : index
    %c0_26 = arith.constant 0 : index
    %29 = vector.load %arg4[%c0_23, %c1_24, %c0_25, %c0_26] : memref<1x4x12x256xbf16, #tpu.memory_space<vmem>>, vector<1x1x12x256xbf16>
    %30 = vector.shape_cast %29 : vector<1x1x12x256xbf16> to vector<12x256xbf16>
    %31 = arith.extf %30 : vector<12x256xbf16> to vector<12x256xf32>
    %c0_27 = arith.constant 0 : index
    %c1_28 = arith.constant 1 : index
    %c0_29 = arith.constant 0 : index
    %c0_30 = arith.constant 0 : index
    %32 = vector.load %arg5[%c0_27, %c1_28, %c0_29, %c0_30] : memref<1x4x1x256xbf16, #tpu.memory_space<vmem>>, vector<1x1x1x256xbf16>
    %33 = vector.shape_cast %32 : vector<1x1x1x256xbf16> to vector<1x256xbf16>
    %34 = arith.extf %33 : vector<1x256xbf16> to vector<1x256xf32>
    %35 = vector.broadcast %34 : vector<1x256xf32> to vector<12x256xf32>
    %36 = arith.mulf %31, %35 : vector<12x256xf32>
    %37 = arith.addf %19, %36 : vector<12x256xf32>
    %c0_31 = arith.constant 0 : index
    %c2 = arith.constant 2 : index
    %c0_32 = arith.constant 0 : index
    %c0_33 = arith.constant 0 : index
    %38 = vector.load %arg2[%c0_31, %c2, %c0_32, %c0_33] : memref<1x4x4x256xbf16, #tpu.memory_space<vmem>>, vector<1x1x4x256xbf16>
    %39 = vector.shape_cast %38 : vector<1x1x4x256xbf16> to vector<4x256xbf16>
    %40 = arith.extf %39 : vector<4x256xbf16> to vector<4x256xf32>
    %c0_34 = arith.constant 0 : index
    %c2_35 = arith.constant 2 : index
    %c0_36 = arith.constant 0 : index
    %c0_37 = arith.constant 0 : index
    %41 = vector.load %arg3[%c0_34, %c2_35, %c0_36, %c0_37] : memref<1x4x1x256xbf16, #tpu.memory_space<vmem>>, vector<1x1x1x256xbf16>
    %42 = vector.shape_cast %41 : vector<1x1x1x256xbf16> to vector<1x256xbf16>
    %43 = arith.extf %42 : vector<1x256xbf16> to vector<1x256xf32>
    %44 = vector.broadcast %43 : vector<1x256xf32> to vector<4x256xf32>
    %45 = arith.mulf %40, %44 : vector<4x256xf32>
    %46 = arith.addf %28, %45 : vector<4x256xf32>
    %c0_38 = arith.constant 0 : index
    %c2_39 = arith.constant 2 : index
    %c0_40 = arith.constant 0 : index
    %c0_41 = arith.constant 0 : index
    %47 = vector.load %arg4[%c0_38, %c2_39, %c0_40, %c0_41] : memref<1x4x12x256xbf16, #tpu.memory_space<vmem>>, vector<1x1x12x256xbf16>
    %48 = vector.shape_cast %47 : vector<1x1x12x256xbf16> to vector<12x256xbf16>
    %49 = arith.extf %48 : vector<12x256xbf16> to vector<12x256xf32>
    %c0_42 = arith.constant 0 : index
    %c2_43 = arith.constant 2 : index
    %c0_44 = arith.constant 0 : index
    %c0_45 = arith.constant 0 : index
    %50 = vector.load %arg5[%c0_42, %c2_43, %c0_44, %c0_45] : memref<1x4x1x256xbf16, #tpu.memory_space<vmem>>, vector<1x1x1x256xbf16>
    %51 = vector.shape_cast %50 : vector<1x1x1x256xbf16> to vector<1x256xbf16>
    %52 = arith.extf %51 : vector<1x256xbf16> to vector<1x256xf32>
    %53 = vector.broadcast %52 : vector<1x256xf32> to vector<12x256xf32>
    %54 = arith.mulf %49, %53 : vector<12x256xf32>
    %55 = arith.addf %37, %54 : vector<12x256xf32>
    %c0_46 = arith.constant 0 : index
    %c3 = arith.constant 3 : index
    %c0_47 = arith.constant 0 : index
    %c0_48 = arith.constant 0 : index
    %56 = vector.load %arg2[%c0_46, %c3, %c0_47, %c0_48] : memref<1x4x4x256xbf16, #tpu.memory_space<vmem>>, vector<1x1x4x256xbf16>
    %57 = vector.shape_cast %56 : vector<1x1x4x256xbf16> to vector<4x256xbf16>
    %58 = arith.extf %57 : vector<4x256xbf16> to vector<4x256xf32>
    %c0_49 = arith.constant 0 : index
    %c3_50 = arith.constant 3 : index
    %c0_51 = arith.constant 0 : index
    %c0_52 = arith.constant 0 : index
    %59 = vector.load %arg3[%c0_49, %c3_50, %c0_51, %c0_52] : memref<1x4x1x256xbf16, #tpu.memory_space<vmem>>, vector<1x1x1x256xbf16>
    %60 = vector.shape_cast %59 : vector<1x1x1x256xbf16> to vector<1x256xbf16>
    %61 = arith.extf %60 : vector<1x256xbf16> to vector<1x256xf32>
    %62 = vector.broadcast %61 : vector<1x256xf32> to vector<4x256xf32>
    %63 = arith.mulf %58, %62 : vector<4x256xf32>
    %64 = arith.addf %46, %63 : vector<4x256xf32>
    %c0_53 = arith.constant 0 : index
    %c3_54 = arith.constant 3 : index
    %c0_55 = arith.constant 0 : index
    %c0_56 = arith.constant 0 : index
    %65 = vector.load %arg4[%c0_53, %c3_54, %c0_55, %c0_56] : memref<1x4x12x256xbf16, #tpu.memory_space<vmem>>, vector<1x1x12x256xbf16>
    %66 = vector.shape_cast %65 : vector<1x1x12x256xbf16> to vector<12x256xbf16>
    %67 = arith.extf %66 : vector<12x256xbf16> to vector<12x256xf32>
    %c0_57 = arith.constant 0 : index
    %c3_58 = arith.constant 3 : index
    %c0_59 = arith.constant 0 : index
    %c0_60 = arith.constant 0 : index
    %68 = vector.load %arg5[%c0_57, %c3_58, %c0_59, %c0_60] : memref<1x4x1x256xbf16, #tpu.memory_space<vmem>>, vector<1x1x1x256xbf16>
    %69 = vector.shape_cast %68 : vector<1x1x1x256xbf16> to vector<1x256xbf16>
    %70 = arith.extf %69 : vector<1x256xbf16> to vector<1x256xf32>
    %71 = vector.broadcast %70 : vector<1x256xf32> to vector<12x256xf32>
    %72 = arith.mulf %67, %71 : vector<12x256xf32>
    %73 = arith.addf %55, %72 : vector<12x256xf32>
    %c0_61 = arith.constant 0 : index
    %c0_62 = arith.constant 0 : index
    %74 = vector.load %arg6[%c0_61, %c0_62] : memref<4x4xbf16, #tpu.memory_space<vmem>>, vector<4x4xbf16>
    %75 = arith.truncf %64 : vector<4x256xf32> to vector<4x256xbf16>
    %cst_63 = arith.constant dense<0.000000e+00> : vector<4x256xf32>
    %76 = tpu.matmul %74, %75, %cst_63 {dimension_numbers = #tpu.dot_dimension_numbers<[1], [0], [0], [1], [0, 0, 1, 1], [], []>} : vector<4x4xbf16>, vector<4x256xbf16>, vector<4x256xf32> -> vector<4x256xf32>
    %c0_64 = arith.constant 0 : index
    %c0_65 = arith.constant 0 : index
    %77 = vector.load %arg7[%c0_64, %c0_65] : memref<4x12xbf16, #tpu.memory_space<vmem>>, vector<4x12xbf16>
    %78 = arith.truncf %73 : vector<12x256xf32> to vector<12x256xbf16>
    %cst_66 = arith.constant dense<0.000000e+00> : vector<4x256xf32>
    %79 = tpu.matmul %77, %78, %cst_66 {dimension_numbers = #tpu.dot_dimension_numbers<[1], [0], [0], [1], [0, 0, 1, 1], [], []>} : vector<4x12xbf16>, vector<12x256xbf16>, vector<4x256xf32> -> vector<4x256xf32>
    %80 = arith.addf %76, %79 : vector<4x256xf32>
    %c0_67 = arith.constant 0 : index
    %c0_68 = arith.constant 0 : index
    %81 = vector.load %arg8[%c0_67, %c0_68] : memref<4x1xf32, #tpu.memory_space<vmem>>, vector<4x1xf32>
    %82 = vector.broadcast %81 : vector<4x1xf32> to vector<4x256xf32>
    %83 = arith.addf %80, %82 : vector<4x256xf32>
    %c0_69 = arith.constant 0 : index
    %c0_70 = arith.constant 0 : index
    %c0_71 = arith.constant 0 : index
    %84 = vector.load %arg9[%c0_69, %c0_70, %c0_71] : memref<1x4x256xf32, #tpu.memory_space<vmem>>, vector<1x4x256xf32>
    %85 = vector.shape_cast %84 : vector<1x4x256xf32> to vector<4x256xf32>
    %86 = vector.shape_cast %83 : vector<4x256xf32> to vector<1x4x256xf32>
    tpu.vector_store %arg9[%c0_69, %c0_70, %c0_71], %86 {strides = array<i32>} : memref<1x4x256xf32, #tpu.memory_space<vmem>>, vector<1x4x256xf32>,
    return
  }
  func.func @transform_0(%arg0: i32, %arg1: i32) -> (i32, i32, i32, i32) {
    %c0_i32 = arith.constant 0 : i32
    %c0_i32_0 = arith.constant 0 : i32
    %c0_i32_1 = arith.constant 0 : i32
    return %arg0, %c0_i32, %c0_i32_0, %arg1 : i32, i32, i32, i32
  }
  func.func @transform_1(%arg0: i32, %arg1: i32) -> (i32, i32, i32, i32) {
    %c0_i32 = arith.constant 0 : i32
    %c0_i32_0 = arith.constant 0 : i32
    %c0_i32_1 = arith.constant 0 : i32
    return %arg0, %c0_i32, %c0_i32_0, %arg1 : i32, i32, i32, i32
  }
  func.func @transform_2(%arg0: i32, %arg1: i32) -> (i32, i32, i32, i32) {
    %c0_i32 = arith.constant 0 : i32
    %c0_i32_0 = arith.constant 0 : i32
    %c0_i32_1 = arith.constant 0 : i32
    return %arg0, %c0_i32, %c0_i32_0, %arg1 : i32, i32, i32, i32
  }
  func.func @transform_3(%arg0: i32, %arg1: i32) -> (i32, i32, i32, i32) {
    %c0_i32 = arith.constant 0 : i32
    %c0_i32_0 = arith.constant 0 : i32
    %c0_i32_1 = arith.constant 0 : i32
    return %arg0, %c0_i32, %c0_i32_0, %arg1 : i32, i32, i32, i32
  }
  func.func @transform_4(%arg0: i32, %arg1: i32) -> (i32, i32) {
    %c0_i32 = arith.constant 0 : i32
    %c0_i32_0 = arith.constant 0 : i32
    %c0_i32_1 = arith.constant 0 : i32
    return %c0_i32, %c0_i32_0 : i32, i32
  }
  func.func @transform_5(%arg0: i32, %arg1: i32) -> (i32, i32) {
    %c0_i32 = arith.constant 0 : i32
    %c0_i32_0 = arith.constant 0 : i32
    %c0_i32_1 = arith.constant 0 : i32
    return %c0_i32, %c0_i32_0 : i32, i32
  }
  func.func @transform_6(%arg0: i32, %arg1: i32) -> (i32, i32) {
    %c0_i32 = arith.constant 0 : i32
    %c0_i32_0 = arith.constant 0 : i32
    %c0_i32_1 = arith.constant 0 : i32
    return %c0_i32, %c0_i32_0 : i32, i32
  }
  func.func @transform_7(%arg0: i32, %arg1: i32) -> (i32, i32, i32) {
    %c0_i32 = arith.constant 0 : i32
    %c0_i32_0 = arith.constant 0 : i32
    return %arg0, %c0_i32, %arg1 : i32, i32, i32
  }
}

</mosaic_0001>

<llo_original>
// kernel: tpu_custom_call.1
$region0: #{tpu_custom_call.1}
  #allocation0 [shape = 'u32[]', space=smem, size = 0x4, offset = 0x4, fixed_abs, tag = 'smem constant byte address 0x4 - core index']
  #allocation1 [shape = 'u32[144,128]{1,0:T(1,128)}', space=vmem, size = 0x12000, scoped, tag = 'internal scratch']
  %s0 = inlined_call_operand.vmem [shape: bf16[2,4,4,256], index: 0, kind: input, shape index: {}]
  %s1 = inlined_call_operand.vmem [shape: bf16[2,4,1,256], index: 1, kind: input, shape index: {}]
  %s2 = inlined_call_operand.vmem [shape: bf16[2,4,12,256], index: 2, kind: input, shape index: {}]
  %s3 = inlined_call_operand.vmem [shape: bf16[2,4,1,256], index: 3, kind: input, shape index: {}]
  %s4 = inlined_call_operand.vmem [shape: bf16[4,4], index: 4, kind: input, shape index: {}]
  %s5 = inlined_call_operand.vmem [shape: bf16[4,12], index: 5, kind: input, shape index: {}]
  %s6 = inlined_call_operand.vmem [shape: f32[4,1], index: 6, kind: input, shape index: {}]
  %s7 = inlined_call_operand.hbm [shape: f32[2,4,256], index: 7, kind: output, shape index: {}]
  %s8 = sld [smem:[#allocation0]]
  $region61: #{tpu_custom_call.1} parent=0
    _
  %s10 = ssub.s32 1, %s8
  %s11 = scalar_select 0, %s10, %s8
  $region1: #{tpu_custom_call.1} parent=0
    #allocation2 [shape = 'u8[8192]{0}', space=vmem, size = 0x2000, scoped, tag = 'output window, operand 0']
    #allocation3 [shape = 's32[2]{0}', space=sflag, size = 0x8, scoped, tag = 'scoped memory for tpu_custom_call.1']
    %12 = vsyncpa [#allocation3], 0
    %s13 = scalar_lea.sflag [#allocation3], 1
    %14 = vsyncpa %s13, 0
    loop: start=0, step=1, limit=4
    $region2: #{tpu_custom_call.1} parent=1 // loop_pre_header
      _
    $region3: #{tpu_custom_call.1} parent=1 // loop_header
      %s16 = sphi 0, %s20
      %p17 = scmp.ge.s32.totalorder %s16, 4
      %s23 = sphi 0, %s35
      %s24 = sphi 0, %s31
      %s25 = sphi 0, %s23
      %s26 = sphi 0, %s24
      %s27 = sphi 0, %s25
      %s28 = sphi 0, %s26
      %s40 = sphi 0, %s42
      %s43 = sphi 0, %s40
      %s44 = sphi 0, %s43
      %s60 = sphi 0, %s44
      %s68 = sphi 0, %s70
      %s71 = sphi 0, %s68
      %s72 = sphi 0, %s71
      %s88 = sphi 0, %s72
      %s96 = sphi 0, %s98
      %s99 = sphi 0, %s96
      %s100 = sphi 0, %s99
      %s116 = sphi 0, %s100
      %s124 = sphi 0, %s126
      %s127 = sphi 0, %s124
      %s128 = sphi 0, %s127
      %s144 = sphi 0, %s128
      %s148 = sphi 0, %s148
      %s150 = sphi 0, %s148
      %s151 = sphi 0, %s150
      %s165 = sphi 0, %s151
      %s169 = sphi 0, %s169
      %s171 = sphi 0, %s169
      %s172 = sphi 0, %s171
      %s186 = sphi 0, %s172
      %s190 = sphi 0, %s190
      %s192 = sphi 0, %s190
      %s193 = sphi 0, %s192
      %s207 = sphi 0, %s193
      %s215 = sphi 0, %s217
      %s218 = sphi 0, %s215
      %s219 = sphi 0, %s218
      %s235 = sphi 0, %s219
    $region4: #{tpu_custom_call.1} parent=1 // loop_header_branch
      %19 = sbr.rel (%p17) target = $region8
    $region5: #{tpu_custom_call.1} parent=1 // loop_body
      %s21 = ssub.s32 %s16, 1
      %s22 = ssub.s32 %s16, 2
      %s29 = sadd.s32 1, %s24
      %p30 = scmp.ge.s32.totalorder %s29, 1
      %s31 = scalar_select %p30, 0, %s29
      %s32 = sadd.s32 1, %s23
      %s33 = scalar_select %p30, %s32, %s23
      %p34 = scmp.ge.s32.totalorder %s33, 2
      %s35 = scalar_select %p34, 0, %s33
      %s36 = ssub.s32 %s23, %s35
      %s37 = ssub.s32 %s24, %s31
      %s38 = sor.u32 %s36, %s37
      %p39 = scmp.eq.s32.totalorder %s38, 0
      %s41 = sadd.s32 %s40, 1
      %s42 = scalar_select %p39, %s40, %s41
      %p45 = pneg %p39
      %p46 = scmp.eq.s32.totalorder %s16, 1
      %p47 = por %p45, %p46
      %p48 = scmp.ne.s32.totalorder %s40, %s43
      %p49 = scmp.eq.s32.totalorder %s16, 0
      %p50 = por %p48, %p49
      %p51 = scmp.ne.s32.totalorder %s40, %s43
      %p52 = scmp.eq.s32.totalorder %s21, 1
      %p53 = por %p51, %p52
      %p54 = scmp.ne.s32.totalorder %s43, %s44
      %p55 = scmp.eq.s32.totalorder %s21, 0
      %p56 = por %p54, %p55
      %p57 = scmp.ne.s32.totalorder %s43, %s44
      %p58 = scmp.eq.s32.totalorder %s22, 1
      %p59 = por %p57, %p58
      %p61 = scmp.ne.s32.totalorder %s44, %s60
      %p62 = scmp.eq.s32.totalorder %s22, 0
      %p63 = por %p61, %p62
      %s64 = ssub.s32 %s23, %s35
      %s65 = ssub.s32 %s24, %s31
      %s66 = sor.u32 %s64, %s65
      %p67 = scmp.eq.s32.totalorder %s66, 0
      %s69 = sadd.s32 %s68, 1
      %s70 = scalar_select %p67, %s68, %s69
      %p73 = pneg %p67
      %p74 = scmp.eq.s32.totalorder %s16, 1
      %p75 = por %p73, %p74
      %p76 = scmp.ne.s32.totalorder %s68, %s71
      %p77 = scmp.eq.s32.totalorder %s16, 0
      %p78 = por %p76, %p77
      %p79 = scmp.ne.s32.totalorder %s68, %s71
      %p80 = scmp.eq.s32.totalorder %s21, 1
      %p81 = por %p79, %p80
      %p82 = scmp.ne.s32.totalorder %s71, %s72
      %p83 = scmp.eq.s32.totalorder %s21, 0
      %p84 = por %p82, %p83
      %p85 = scmp.ne.s32.totalorder %s71, %s72
      %p86 = scmp.eq.s32.totalorder %s22, 1
      %p87 = por %p85, %p86
      %p89 = scmp.ne.s32.totalorder %s72, %s88
      %p90 = scmp.eq.s32.totalorder %s22, 0
      %p91 = por %p89, %p90
      %s92 = ssub.s32 %s23, %s35
      %s93 = ssub.s32 %s24, %s31
      %s94 = sor.u32 %s92, %s93
      %p95 = scmp.eq.s32.totalorder %s94, 0
      %s97 = sadd.s32 %s96, 1
      %s98 = scalar_select %p95, %s96, %s97
      %p101 = pneg %p95
      %p102 = scmp.eq.s32.totalorder %s16, 1
      %p103 = por %p101, %p102
      %p104 = scmp.ne.s32.totalorder %s96, %s99
      %p105 = scmp.eq.s32.totalorder %s16, 0
      %p106 = por %p104, %p105
      %p107 = scmp.ne.s32.totalorder %s96, %s99
      %p108 = scmp.eq.s32.totalorder %s21, 1
      %p109 = por %p107, %p108
      %p110 = scmp.ne.s32.totalorder %s99, %s100
      %p111 = scmp.eq.s32.totalorder %s21, 0
      %p112 = por %p110, %p111
      %p113 = scmp.ne.s32.totalorder %s99, %s100
      %p114 = scmp.eq.s32.totalorder %s22, 1
      %p115 = por %p113, %p114
      %p117 = scmp.ne.s32.totalorder %s100, %s116
      %p118 = scmp.eq.s32.totalorder %s22, 0
      %p119 = por %p117, %p118
      %s120 = ssub.s32 %s23, %s35
      %s121 = ssub.s32 %s24, %s31
      %s122 = sor.u32 %s120, %s121
      %p123 = scmp.eq.s32.totalorder %s122, 0
      %s125 = sadd.s32 %s124, 1
      %s126 = scalar_select %p123, %s124, %s125
      %p129 = pneg %p123
      %p130 = scmp.eq.s32.totalorder %s16, 1
      %p131 = por %p129, %p130
      %p132 = scmp.ne.s32.totalorder %s124, %s127
      %p133 = scmp.eq.s32.totalorder %s16, 0
      %p134 = por %p132, %p133
      %p135 = scmp.ne.s32.totalorder %s124, %s127
      %p136 = scmp.eq.s32.totalorder %s21, 1
      %p137 = por %p135, %p136
      %p138 = scmp.ne.s32.totalorder %s127, %s128
      %p139 = scmp.eq.s32.totalorder %s21, 0
      %p140 = por %p138, %p139
      %p141 = scmp.ne.s32.totalorder %s127, %s128
      %p142 = scmp.eq.s32.totalorder %s22, 1
      %p143 = por %p141, %p142
      %p145 = scmp.ne.s32.totalorder %s128, %s144
      %p146 = scmp.eq.s32.totalorder %s22, 0
      %p147 = por %p145, %p146
      %s149 = sadd.s32 %s148, 1
      %p152 = scmp.eq.s32.totalorder %s16, 1
      %p153 = scmp.ne.s32.totalorder %s148, %s150
      %p154 = scmp.eq.s32.totalorder %s16, 0
      %p155 = por %p153, %p154
      %p156 = scmp.ne.s32.totalorder %s148, %s150
      %p157 = scmp.eq.s32.totalorder %s21, 1
      %p158 = por %p156, %p157
      %p159 = scmp.ne.s32.totalorder %s150, %s151
      %p160 = scmp.eq.s32.totalorder %s21, 0
      %p161 = por %p159, %p160
      %p162 = scmp.ne.s32.totalorder %s150, %s151
      %p163 = scmp.eq.s32.totalorder %s22, 1
      %p164 = por %p162, %p163
      %p166 = scmp.ne.s32.totalorder %s151, %s165
      %p167 = scmp.eq.s32.totalorder %s22, 0
      %p168 = por %p166, %p167
      %s170 = sadd.s32 %s169, 1
      %p173 = scmp.eq.s32.totalorder %s16, 1
      %p174 = scmp.ne.s32.totalorder %s169, %s171
      %p175 = scmp.eq.s32.totalorder %s16, 0
      %p176 = por %p174, %p175
      %p177 = scmp.ne.s32.totalorder %s169, %s171
      %p178 = scmp.eq.s32.totalorder %s21, 1
      %p179 = por %p177, %p178
      %p180 = scmp.ne.s32.totalorder %s171, %s172
      %p181 = scmp.eq.s32.totalorder %s21, 0
      %p182 = por %p180, %p181
      %p183 = scmp.ne.s32.totalorder %s171, %s172
      %p184 = scmp.eq.s32.totalorder %s22, 1
      %p185 = por %p183, %p184
      %p187 = scmp.ne.s32.totalorder %s172, %s186
      %p188 = scmp.eq.s32.totalorder %s22, 0
      %p189 = por %p187, %p188
      %s191 = sadd.s32 %s190, 1
      %p194 = scmp.eq.s32.totalorder %s16, 1
      %p195 = scmp.ne.s32.totalorder %s190, %s192
      %p196 = scmp.eq.s32.totalorder %s16, 0
      %p197 = por %p195, %p196
      %p198 = scmp.ne.s32.totalorder %s190, %s192
      %p199 = scmp.eq.s32.totalorder %s21, 1
      %p200 = por %p198, %p199
      %p201 = scmp.ne.s32.totalorder %s192, %s193
      %p202 = scmp.eq.s32.totalorder %s21, 0
      %p203 = por %p201, %p202
      %p204 = scmp.ne.s32.totalorder %s192, %s193
      %p205 = scmp.eq.s32.totalorder %s22, 1
      %p206 = por %p204, %p205
      %p208 = scmp.ne.s32.totalorder %s193, %s207
      %p209 = scmp.eq.s32.totalorder %s22, 0
      %p210 = por %p208, %p209
      %s211 = ssub.s32 %s23, %s35
      %s212 = ssub.s32 %s24, %s31
      %s213 = sor.u32 %s211, %s212
      %p214 = scmp.eq.s32.totalorder %s213, 0
      %s216 = sadd.s32 %s215, 1
      %s217 = scalar_select %p214, %s215, %s216
      %p220 = pneg %p214
      %p221 = scmp.eq.s32.totalorder %s16, 1
      %p222 = por %p220, %p221
      %p223 = scmp.ne.s32.totalorder %s215, %s218
      %p224 = scmp.eq.s32.totalorder %s16, 0
      %p225 = por %p223, %p224
      %p226 = scmp.ne.s32.totalorder %s215, %s218
      %p227 = scmp.eq.s32.totalorder %s21, 1
      %p228 = por %p226, %p227
      %p229 = scmp.ne.s32.totalorder %s218, %s219
      %p230 = scmp.eq.s32.totalorder %s21, 0
      %p231 = por %p229, %p230
      %p232 = scmp.ne.s32.totalorder %s218, %s219
      %p233 = scmp.eq.s32.totalorder %s22, 1
      %p234 = por %p232, %p233
      %p236 = scmp.ne.s32.totalorder %s219, %s235
      %p237 = scmp.eq.s32.totalorder %s22, 0
      %p238 = por %p236, %p237
      %p239 = scmp.le.s32.totalorder 1, %s16
      %p240 = scmp.lt.s32.totalorder %s16, 3
      %p241 = pnand %p239, %p240
      %p242 = pneg %p241
      // Predicated region
      $region9: #{tpu_custom_call.1} parent=5 // pred_check
        _
      $region10: #{tpu_custom_call.1} parent=5 // pred_check_branch
        %244 = sbr.rel (%p241) target = $region12
      $region11: #{tpu_custom_call.1} parent=5 // pred_region
        %s245 = ssub.s32 %s16, 1
        // Predicated region
        $region13: #{tpu_custom_call.1} parent=11 // pred_check
          %p246 = pneg %p161
        $region14: #{tpu_custom_call.1} parent=11 // pred_check_branch
          %248 = sbr.rel (%p246) target = $region16
        $region15: #{tpu_custom_call.1} parent=11 // pred_region
          _
        $region16: #{tpu_custom_call.1} parent=11 // pred_fallthru
          _
        // Predicated region
        $region17: #{tpu_custom_call.1} parent=11 // pred_check
          %p249 = pneg %p182
        $region18: #{tpu_custom_call.1} parent=11 // pred_check_branch
          %251 = sbr.rel (%p249) target = $region20
        $region19: #{tpu_custom_call.1} parent=11 // pred_region
          _
        $region20: #{tpu_custom_call.1} parent=11 // pred_fallthru
          _
        // Predicated region
        $region21: #{tpu_custom_call.1} parent=11 // pred_check
          %p252 = pneg %p203
        $region22: #{tpu_custom_call.1} parent=11 // pred_check_branch
          %254 = sbr.rel (%p252) target = $region24
        $region23: #{tpu_custom_call.1} parent=11 // pred_region
          _
        $region24: #{tpu_custom_call.1} parent=11 // pred_fallthru
          _
      $region12: #{tpu_custom_call.1} parent=5 // pred_fallthru
        _
      %p255 = scmp.lt.s32.totalorder %s16, 2
      // Predicated region
      $region25: #{tpu_custom_call.1} parent=5 // pred_check
        %p256 = pneg %p255
      $region26: #{tpu_custom_call.1} parent=5 // pred_check_branch
        %258 = sbr.rel (%p256) target = $region28
      $region27: #{tpu_custom_call.1} parent=5 // pred_region
        // Predicated region
        $region29: #{tpu_custom_call.1} parent=27 // pred_check
          %p259 = pneg %p50
        $region30: #{tpu_custom_call.1} parent=27 // pred_check_branch
          %261 = sbr.rel (%p259) target = $region32
        $region31: #{tpu_custom_call.1} parent=27 // pred_region
          %s262 = smul.u32 2, %s24
          %p263 = scmp.lt.s32.totalorder %s23, 1
          %s264 = scalar_select %p263, %s23, 1
          %p265 = scmp.lt.s32.totalorder %s262, 1
          %s266 = scalar_select %p265, %s262, 1
          %s267 = smul.addr %s264, 8
          %s268 = sadd.s32 %s266, %s267
          %s269 = smul.addr %s268, 2
          %s270 = scalar_lea.vmem %s0, %s269
          %s271 = smul.u32 2, %s24
        $region32: #{tpu_custom_call.1} parent=27 // pred_fallthru
          _
        // Predicated region
        $region33: #{tpu_custom_call.1} parent=27 // pred_check
          %p272 = pneg %p78
        $region34: #{tpu_custom_call.1} parent=27 // pred_check_branch
          %274 = sbr.rel (%p272) target = $region36
        $region35: #{tpu_custom_call.1} parent=27 // pred_region
          %s275 = smul.u32 2, %s24
          %p276 = scmp.lt.s32.totalorder %s23, 1
          %s277 = scalar_select %p276, %s23, 1
          %p278 = scmp.lt.s32.totalorder %s275, 1
          %s279 = scalar_select %p278, %s275, 1
          %s280 = smul.addr %s277, 8
          %s281 = sadd.s32 %s279, %s280
          %s282 = scalar_lea.vmem %s1, %s281
          %s283 = smul.u32 2, %s24
        $region36: #{tpu_custom_call.1} parent=27 // pred_fallthru
          _
        // Predicated region
        $region37: #{tpu_custom_call.1} parent=27 // pred_check
          %p284 = pneg %p106
        $region38: #{tpu_custom_call.1} parent=27 // pred_check_branch
          %286 = sbr.rel (%p284) target = $region40
        $region39: #{tpu_custom_call.1} parent=27 // pred_region
          %s287 = smul.u32 2, %s24
          %p288 = scmp.lt.s32.totalorder %s23, 1
          %s289 = scalar_select %p288, %s23, 1
          %p290 = scmp.lt.s32.totalorder %s287, 1
          %s291 = scalar_select %p290, %s287, 1
          %s292 = smul.addr %s289, 16
          %s293 = sadd.s32 %s291, %s292
          %s294 = smul.addr %s293, 4
          %s295 = scalar_lea.vmem %s2, %s294
          %s296 = smul.u32 2, %s24
        $region40: #{tpu_custom_call.1} parent=27 // pred_fallthru
          _
        // Predicated region
        $region41: #{tpu_custom_call.1} parent=27 // pred_check
          %p297 = pneg %p134
        $region42: #{tpu_custom_call.1} parent=27 // pred_check_branch
          %299 = sbr.rel (%p297) target = $region44
        $region43: #{tpu_custom_call.1} parent=27 // pred_region
          %s300 = smul.u32 2, %s24
          %p301 = scmp.lt.s32.totalorder %s23, 1
          %s302 = scalar_select %p301, %s23, 1
          %p303 = scmp.lt.s32.totalorder %s300, 1
          %s304 = scalar_select %p303, %s300, 1
          %s305 = smul.addr %s302, 8
          %s306 = sadd.s32 %s304, %s305
          %s307 = scalar_lea.vmem %s3, %s306
          %s308 = smul.u32 2, %s24
        $region44: #{tpu_custom_call.1} parent=27 // pred_fallthru
          _
      $region28: #{tpu_custom_call.1} parent=5 // pred_fallthru
        _
      %p309 = scmp.le.s32.totalorder 1, %s16
      %p310 = scmp.lt.s32.totalorder %s16, 3
      %p311 = pnand %p309, %p310
      %p312 = pneg %p311
      // Predicated region
      $region45: #{tpu_custom_call.1} parent=5 // pred_check
        _
      $region46: #{tpu_custom_call.1} parent=5 // pred_check_branch
        %314 = sbr.rel (%p311) target = $region48
      $region47: #{tpu_custom_call.1} parent=5 // pred_region
        %s315 = ssub.s32 %s16, 1
        %s316 = smul.u32 2, %s26
        %p317 = scmp.lt.s32.totalorder %s25, 1
        %s318 = scalar_select %p317, %s25, 1
        %p319 = scmp.lt.s32.totalorder %s316, 1
        %s320 = scalar_select %p319, %s316, 1
        %s321 = smul.addr %s318, 8
        %s322 = sadd.s32 %s320, %s321
        %s323 = smul.addr %s322, 2
        %s324 = scalar_lea.vmem %s0, %s323
        %p325 = pneg %p56
        %p326 = pneg %p53
        %s327 = smul.u32 2, %s26
        %p328 = scmp.lt.s32.totalorder %s25, 1
        %s329 = scalar_select %p328, %s25, 1
        %p330 = scmp.lt.s32.totalorder %s327, 1
        %s331 = scalar_select %p330, %s327, 1
        %s332 = smul.addr %s329, 8
        %s333 = sadd.s32 %s331, %s332
        %s334 = scalar_lea.vmem %s1, %s333
        %p335 = pneg %p84
        %p336 = pneg %p81
        %s337 = smul.u32 2, %s26
        %p338 = scmp.lt.s32.totalorder %s25, 1
        %s339 = scalar_select %p338, %s25, 1
        %p340 = scmp.lt.s32.totalorder %s337, 1
        %s341 = scalar_select %p340, %s337, 1
        %s342 = smul.addr %s339, 16
        %s343 = sadd.s32 %s341, %s342
        %s344 = smul.addr %s343, 4
        %s345 = scalar_lea.vmem %s2, %s344
        %p346 = pneg %p112
        %p347 = pneg %p109
        %s348 = smul.u32 2, %s26
        %p349 = scmp.lt.s32.totalorder %s25, 1
        %s350 = scalar_select %p349, %s25, 1
        %p351 = scmp.lt.s32.totalorder %s348, 1
        %s352 = scalar_select %p351, %s348, 1
        %s353 = smul.addr %s350, 8
        %s354 = sadd.s32 %s352, %s353
        %s355 = scalar_lea.vmem %s3, %s354
        %p356 = pneg %p140
        %p357 = pneg %p137
        %p358 = pneg %p161
        %p359 = pneg %p158
        %p360 = pneg %p182
        %p361 = pneg %p179
        %p362 = pneg %p203
        %p363 = pneg %p200
        %p364 = pneg %p231
        %p365 = pneg %p228
        %s366 = sand.u32 %s218, 1
        %s367 = scalar_lea.sflag [#allocation3], %s366
        %s368 = sand.u32 %s218, 1
        %s369 = smul.addr %s368, 8
        %s370 = scalar_lea.vmem [#allocation2], %s369
        %s371 = smul.u32 2, %s26
        %p372 = scmp.lt.s32.totalorder %s25, 1
        %s373 = scalar_select %p372, %s25, 1
        %p374 = scmp.lt.s32.totalorder %s371, 1
        %s375 = scalar_select %p374, %s371, 1
        %s376 = smul.addr %s373, 8
        %s377 = sadd.s32 %s375, %s376
        %s378 = smul.addr %s377, 2
        %s379 = scalar_lea.vmem %s0, %s378
        %s380 = smul.u32 2, %s26
        %s381 = smul.u32 2, %s26
        %p382 = scmp.lt.s32.totalorder %s25, 1
        %s383 = scalar_select %p382, %s25, 1
        %p384 = scmp.lt.s32.totalorder %s381, 1
        %s385 = scalar_select %p384, %s381, 1
        %s386 = smul.addr %s383, 8
        %s387 = sadd.s32 %s385, %s386
        %s388 = scalar_lea.vmem %s1, %s387
        %s389 = smul.u32 2, %s26
        %s390 = smul.u32 2, %s26
        %p391 = scmp.lt.s32.totalorder %s25, 1
        %s392 = scalar_select %p391, %s25, 1
        %p393 = scmp.lt.s32.totalorder %s390, 1
        %s394 = scalar_select %p393, %s390, 1
        %s395 = smul.addr %s392, 16
        %s396 = sadd.s32 %s394, %s395
        %s397 = smul.addr %s396, 4
        %s398 = scalar_lea.vmem %s2, %s397
        %s399 = smul.u32 2, %s26
        %s400 = smul.u32 2, %s26
        %p401 = scmp.lt.s32.totalorder %s25, 1
        %s402 = scalar_select %p401, %s25, 1
        %p403 = scmp.lt.s32.totalorder %s400, 1
        %s404 = scalar_select %p403, %s400, 1
        %s405 = smul.addr %s402, 8
        %s406 = sadd.s32 %s404, %s405
        %s407 = scalar_lea.vmem %s3, %s406
        %s408 = smul.u32 2, %s26
        %s409 = smul.u32 2, %s26
        %v411 = vld [vmem:[%s379] sm:$0xf]
        %v412 = vunpack.c.l.bf16 %v411
        %v413 = vld [vmem:[%s388] sm:$0x3]
        %v414 = vunpack.c.l.bf16 %v413
        %v416 = vlaneseq
        %v417 = vshrl.u32 %v416, 7
        %v418 = vsub.s32 0, %v417
        %v419 = vrot.slane %v414, %v418
        %v420 = vlaneseq
        %v421 = vshrl.u32 %v420, 7
        %v422 = vsub.s32 2, %v421
        %v423 = vrot.slane %v414, %v422
        %v426 = vlaneseq
        %v427 = vshrl.u32 %v426, 7
        %v428 = vsub.s32 0, %v427
        %v429 = vrot.slane %v419, %v428
        %v430 = vlaneseq
        %v431 = vshrl.u32 %v430, 7
        %v432 = vsub.s32 0, %v431
        %v433 = vrot.slane %v423, %v432
        %v436 = vcombine.low %v429, %v433
        %v438 = vmul.f32 %v412, %v436
        %v439 = vadd.f32 %v438, 0.0
        %v440 = vld [vmem:[%s398] sm:$0xff]
        %v441 = vld [vmem:[%s398 + $0x8] sm:$0x33]
        %v442 = vunpack.c.l.bf16 %v440
        %v443 = vunpack.c.h.bf16 %v440
        %v444 = vunpack.c.l.bf16 %v441
        %v445 = vunpack.c.h.bf16 %v441
        %v446 = vld [vmem:[%s407] sm:$0x3]
        %v447 = vunpack.c.l.bf16 %v446
        %v449 = vlaneseq
        %v450 = vshrl.u32 %v449, 7
        %v451 = vsub.s32 0, %v450
        %v452 = vrot.slane %v447, %v451
        %v453 = vlaneseq
        %v454 = vshrl.u32 %v453, 7
        %v455 = vsub.s32 2, %v454
        %v456 = vrot.slane %v447, %v455
        %v459 = vlaneseq
        %v460 = vshrl.u32 %v459, 7
        %v461 = vsub.s32 0, %v460
        %v462 = vrot.slane %v452, %v461
        %v463 = vlaneseq
        %v464 = vshrl.u32 %v463, 7
        %v465 = vsub.s32 0, %v464
        %v466 = vrot.slane %v456, %v465
        %v467 = vmul.f32 %v442, %v462
        %v468 = vmul.f32 %v443, %v466
        %v469 = vmul.f32 %v444, %v462
        %v470 = vmul.f32 %v445, %v466
        %v471 = vadd.f32 %v467, 0.0
        %v472 = vadd.f32 %v468, 0.0
        %v473 = vadd.f32 %v469, 0.0
        %v474 = vadd.f32 %v470, 0.0
        %s475 = scalar_lea.vmem %s379, 4
        %v476 = vld [vmem:[%s475] sm:$0xf]
        %v477 = vunpack.c.l.bf16 %v476
        %s478 = scalar_lea.vmem %s388, 2
        %v479 = vld [vmem:[%s478] sm:$0x3]
        %v480 = vunpack.c.l.bf16 %v479
        %v482 = vlaneseq
        %v483 = vshrl.u32 %v482, 7
        %v484 = vsub.s32 0, %v483
        %v485 = vrot.slane %v480, %v484
        %v486 = vlaneseq
        %v487 = vshrl.u32 %v486, 7
        %v488 = vsub.s32 2, %v487
        %v489 = vrot.slane %v480, %v488
        %v492 = vlaneseq
        %v493 = vshrl.u32 %v492, 7
        %v494 = vsub.s32 0, %v493
        %v495 = vrot.slane %v485, %v494
        %v496 = vlaneseq
        %v497 = vshrl.u32 %v496, 7
        %v498 = vsub.s32 0, %v497
        %v499 = vrot.slane %v489, %v498
        %v502 = vcombine.low %v495, %v499
        %v504 = vmul.f32 %v477, %v502
        %v505 = vadd.f32 %v439, %v504
        %s506 = scalar_lea.vmem %s398, 16
        %v507 = vld [vmem:[%s506] sm:$0xff]
        %v508 = vld [vmem:[%s506 + $0x8] sm:$0x33]
        %v509 = vunpack.c.l.bf16 %v507
        %v510 = vunpack.c.h.bf16 %v507
        %v511 = vunpack.c.l.bf16 %v508
        %v512 = vunpack.c.h.bf16 %v508
        %s513 = scalar_lea.vmem %s407, 2
        %v514 = vld [vmem:[%s513] sm:$0x3]
        %v515 = vunpack.c.l.bf16 %v514
        %v517 = vlaneseq
        %v518 = vshrl.u32 %v517, 7
        %v519 = vsub.s32 0, %v518
        %v520 = vrot.slane %v515, %v519
        %v521 = vlaneseq
        %v522 = vshrl.u32 %v521, 7
        %v523 = vsub.s32 2, %v522
        %v524 = vrot.slane %v515, %v523
        %v527 = vlaneseq
        %v528 = vshrl.u32 %v527, 7
        %v529 = vsub.s32 0, %v528
        %v530 = vrot.slane %v520, %v529
        %v531 = vlaneseq
        %v532 = vshrl.u32 %v531, 7
        %v533 = vsub.s32 0, %v532
        %v534 = vrot.slane %v524, %v533
        %v535 = vmul.f32 %v509, %v530
        %v536 = vmul.f32 %v510, %v534
        %v537 = vmul.f32 %v511, %v530
        %v538 = vmul.f32 %v512, %v534
        %v539 = vadd.f32 %v471, %v535
        %v540 = vadd.f32 %v472, %v536
        %v541 = vadd.f32 %v473, %v537
        %v542 = vadd.f32 %v474, %v538
        %s543 = scalar_lea.vmem %s379, 8
        %v544 = vld [vmem:[%s543] sm:$0xf]
        %v545 = vunpack.c.l.bf16 %v544
        %s546 = scalar_lea.vmem %s388, 4
        %v547 = vld [vmem:[%s546] sm:$0x3]
        %v548 = vunpack.c.l.bf16 %v547
        %v550 = vlaneseq
        %v551 = vshrl.u32 %v550, 7
        %v552 = vsub.s32 0, %v551
        %v553 = vrot.slane %v548, %v552
        %v554 = vlaneseq
        %v555 = vshrl.u32 %v554, 7
        %v556 = vsub.s32 2, %v555
        %v557 = vrot.slane %v548, %v556
        %v560 = vlaneseq
        %v561 = vshrl.u32 %v560, 7
        %v562 = vsub.s32 0, %v561
        %v563 = vrot.slane %v553, %v562
        %v564 = vlaneseq
        %v565 = vshrl.u32 %v564, 7
        %v566 = vsub.s32 0, %v565
        %v567 = vrot.slane %v557, %v566
        %v570 = vcombine.low %v563, %v567
        %v572 = vmul.f32 %v545, %v570
        %v573 = vadd.f32 %v505, %v572
        %s574 = scalar_lea.vmem %s398, 32
        %v575 = vld [vmem:[%s574] sm:$0xff]
        %v576 = vld [vmem:[%s574 + $0x8] sm:$0x33]
        %v577 = vunpack.c.l.bf16 %v575
        %v578 = vunpack.c.h.bf16 %v575
        %v579 = vunpack.c.l.bf16 %v576
        %v580 = vunpack.c.h.bf16 %v576
        %s581 = scalar_lea.vmem %s407, 4
        %v582 = vld [vmem:[%s581] sm:$0x3]
        %v583 = vunpack.c.l.bf16 %v582
        %v585 = vlaneseq
        %v586 = vshrl.u32 %v585, 7
        %v587 = vsub.s32 0, %v586
        %v588 = vrot.slane %v583, %v587
        %v589 = vlaneseq
        %v590 = vshrl.u32 %v589, 7
        %v591 = vsub.s32 2, %v590
        %v592 = vrot.slane %v583, %v591
        %v595 = vlaneseq
        %v596 = vshrl.u32 %v595, 7
        %v597 = vsub.s32 0, %v596
        %v598 = vrot.slane %v588, %v597
        %v599 = vlaneseq
        %v600 = vshrl.u32 %v599, 7
        %v601 = vsub.s32 0, %v600
        %v602 = vrot.slane %v592, %v601
        %v603 = vmul.f32 %v577, %v598
        %v604 = vmul.f32 %v578, %v602
        %v605 = vmul.f32 %v579, %v598
        %v606 = vmul.f32 %v580, %v602
        %v607 = vadd.f32 %v539, %v603
        %v608 = vadd.f32 %v540, %v604
        %v609 = vadd.f32 %v541, %v605
        %v610 = vadd.f32 %v542, %v606
        %s611 = scalar_lea.vmem %s379, 12
        %v612 = vld [vmem:[%s611] sm:$0xf]
        %v613 = vunpack.c.l.bf16 %v612
        %s614 = scalar_lea.vmem %s388, 6
        %v615 = vld [vmem:[%s614] sm:$0x3]
        %v616 = vunpack.c.l.bf16 %v615
        %v618 = vlaneseq
        %v619 = vshrl.u32 %v618, 7
        %v620 = vsub.s32 0, %v619
        %v621 = vrot.slane %v616, %v620
        %v622 = vlaneseq
        %v623 = vshrl.u32 %v622, 7
        %v624 = vsub.s32 2, %v623
        %v625 = vrot.slane %v616, %v624
        %v628 = vlaneseq
        %v629 = vshrl.u32 %v628, 7
        %v630 = vsub.s32 0, %v629
        %v631 = vrot.slane %v621, %v630
        %v632 = vlaneseq
        %v633 = vshrl.u32 %v632, 7
        %v634 = vsub.s32 0, %v633
        %v635 = vrot.slane %v625, %v634
        %v638 = vcombine.low %v631, %v635
        %v640 = vmul.f32 %v613, %v638
        %v641 = vadd.f32 %v573, %v640
        %s642 = scalar_lea.vmem %s398, 48
        %v643 = vld [vmem:[%s642] sm:$0xff]
        %v644 = vld [vmem:[%s642 + $0x8] sm:$0x33]
        %v645 = vunpack.c.l.bf16 %v643
        %v646 = vunpack.c.h.bf16 %v643
        %v647 = vunpack.c.l.bf16 %v644
        %v648 = vunpack.c.h.bf16 %v644
        %s649 = scalar_lea.vmem %s407, 6
        %v650 = vld [vmem:[%s649] sm:$0x3]
        %v651 = vunpack.c.l.bf16 %v650
        %v653 = vlaneseq
        %v654 = vshrl.u32 %v653, 7
        %v655 = vsub.s32 0, %v654
        %v656 = vrot.slane %v651, %v655
        %v657 = vlaneseq
        %v658 = vshrl.u32 %v657, 7
        %v659 = vsub.s32 2, %v658
        %v660 = vrot.slane %v651, %v659
        %v663 = vlaneseq
        %v664 = vshrl.u32 %v663, 7
        %v665 = vsub.s32 0, %v664
        %v666 = vrot.slane %v656, %v665
        %v667 = vlaneseq
        %v668 = vshrl.u32 %v667, 7
        %v669 = vsub.s32 0, %v668
        %v670 = vrot.slane %v660, %v669
        %v671 = vmul.f32 %v645, %v666
        %v672 = vmul.f32 %v646, %v670
        %v673 = vmul.f32 %v647, %v666
        %v674 = vmul.f32 %v648, %v670
        %v675 = vadd.f32 %v607, %v671
        %v676 = vadd.f32 %v608, %v672
        %v677 = vadd.f32 %v609, %v673
        %v678 = vadd.f32 %v610, %v674
        %v679 = vld [vmem:[%s4] sm:$0x3]
        %v681 = vcombine.high %v641, %v641
        %v683 = vpack.c.bf16 %v641, %v641
        %v684 = vpack.c.bf16 %v681, %v681
        %v685 = vld [vmem:[%s5] sm:$0x3]
        %v686 = vpack.c.bf16 %v677, %v675
        %v687 = vpack.c.bf16 %v678, %v676
        %vm688 = vcmask 97280
        %v690 = vsel %vm688, %v685, 0
        %vm692 = vcmask 1045504
        %v694 = vsel %vm692, %v686, 0
        %v697 = vsel %vm692, %v687, 0
        %699 = vmatprep.subr.bf16.mxu0 %v697
        %700 = vmatpush1.bf16.msra.mxu0 %v694
        %701 = vmatprep.subr.bf16.mxu0 0
        %702 = vmatpush1.bf16.msra.mxu0 0
        %703 = vmatprep.subr.bf16.mxu0 0
        %704 = vmatpush1.bf16.msra.mxu0 0
        %705 = vmatprep.subr.bf16.mxu0 0
        %706 = vmatpush1.bf16.msra.mxu0 0
        %707 = vmatprep.subr.bf16.mxu0 0
        %708 = vmatpush1.bf16.msra.mxu0 0
        %709 = vmatprep.subr.bf16.mxu0 0
        %710 = vmatpush1.bf16.msra.mxu0 0
        %711 = vmatprep.subr.bf16.mxu0 0
        %712 = vmatpush1.bf16.msra.mxu0 0
        %713 = vmatprep.subr.bf16.mxu0 0
        %714 = vmatpush1.bf16.msra.mxu0 0
        %715 = vmatprep.subr.bf16.mxu0 0
        %716 = vmatpush1.bf16.msra.mxu0 0
        %717 = vmatprep.subr.bf16.mxu0 0
        %718 = vmatpush1.bf16.msra.mxu0 0
        %719 = vmatprep.subr.bf16.mxu0 0
        %720 = vmatpush1.bf16.msra.mxu0 0
        %721 = vmatprep.subr.bf16.mxu0 0
        %722 = vmatpush1.bf16.msra.mxu0 0
        %723 = vmatprep.subr.bf16.mxu0 0
        %724 = vmatpush1.bf16.msra.mxu0 0
        %725 = vmatprep.subr.bf16.mxu0 0
        %726 = vmatpush1.bf16.msra.mxu0 0
        %727 = vmatprep.subr.bf16.mxu0 0
        %728 = vmatpush1.bf16.msra.mxu0 0
        %729 = vmatprep.subr.bf16.mxu0 0
        %730 = vmatpush1.bf16.msra.mxu0 0
        %731 = vmatprep.mubr.bf16.mxu0 0
        %732 = vmatmul.mubr.bf16.gmra.mrb[0].mxu0 %v690
        %v733 = vpop.f32.mrb[0].mxu0
        %v734 = vadd.f32 0.0, %v733
        %v735 = vpop.f32.mrb[0].mxu0
        %v736 = vadd.f32 0.0, %v735
        %v737 = vpop.f32.mrb[0].mxu0
        %v738 = vpop.f32.mrb[0].mxu0
        %739 = vdwg.mxu0
        %vm740 = vcmask 31744
        %v742 = vsel %vm740, %v679, 0
        %vm744 = vcmask 1041408
        %v746 = vsel %vm744, %v683, 0
        %v749 = vsel %vm744, %v684, 0
        %751 = vmatprep.subr.bf16.mxu0 %v749
        %752 = vmatpush1.bf16.msra.mxu0 %v746
        %753 = vmatprep.subr.bf16.mxu0 0
        %754 = vmatpush1.bf16.msra.mxu0 0
        %755 = vmatprep.subr.bf16.mxu0 0
        %756 = vmatpush1.bf16.msra.mxu0 0
        %757 = vmatprep.subr.bf16.mxu0 0
        %758 = vmatpush1.bf16.msra.mxu0 0
        %759 = vmatprep.subr.bf16.mxu0 0
        %760 = vmatpush1.bf16.msra.mxu0 0
        %761 = vmatprep.subr.bf16.mxu0 0
        %762 = vmatpush1.bf16.msra.mxu0 0
        %763 = vmatprep.subr.bf16.mxu0 0
        %764 = vmatpush1.bf16.msra.mxu0 0
        %765 = vmatprep.subr.bf16.mxu0 0
        %766 = vmatpush1.bf16.msra.mxu0 0
        %767 = vmatprep.subr.bf16.mxu0 0
        %768 = vmatpush1.bf16.msra.mxu0 0
        %769 = vmatprep.subr.bf16.mxu0 0
        %770 = vmatpush1.bf16.msra.mxu0 0
        %771 = vmatprep.subr.bf16.mxu0 0
        %772 = vmatpush1.bf16.msra.mxu0 0
        %773 = vmatprep.subr.bf16.mxu0 0
        %774 = vmatpush1.bf16.msra.mxu0 0
        %775 = vmatprep.subr.bf16.mxu0 0
        %776 = vmatpush1.bf16.msra.mxu0 0
        %777 = vmatprep.subr.bf16.mxu0 0
        %778 = vmatpush1.bf16.msra.mxu0 0
        %779 = vmatprep.subr.bf16.mxu0 0
        %780 = vmatpush1.bf16.msra.mxu0 0
        %781 = vmatprep.subr.bf16.mxu0 0
        %782 = vmatpush1.bf16.msra.mxu0 0
        %783 = vmatprep.mubr.bf16.mxu0 0
        %784 = vmatmul.mubr.bf16.gmra.mrb[0].mxu0 %v742
        %v785 = vpop.f32.mrb[0].mxu0
        %v786 = vadd.f32 %v734, %v785
        %v787 = vpop.f32.mrb[0].mxu0
        %v788 = vadd.f32 %v736, %v787
        %v789 = vpop.f32.mrb[0].mxu0
        %v790 = vpop.f32.mrb[0].mxu0
        %791 = vdwg.mxu0
        %v792 = vld [vmem:[%s6] sm:$0xf]
        %794 = vset.pattern.permute.xlu0 0
        %795 = vperm.xlu0 %794, %v792
        %v796 = vpop.permute.xlu0 %795
        %v798 = vadd.f32 %v786, %v796
        %v799 = vadd.f32 %v788, %v796
        %v802 = vcombine.low %v798, %v799
        %804 = vst [vmem:[%s370] sm:$0xff] %v802
        %s805 = sand.u32 %s218, 1
        %s806 = scalar_lea.sflag [#allocation3], %s805
        %s807 = sand.u32 %s218, 1
        %s808 = smul.addr %s807, 8
        %s809 = scalar_lea.vmem [#allocation2], %s808
        // Predicated region
        $region49: #{tpu_custom_call.1} parent=47 // pred_check
          %p810 = pneg %p228
        $region50: #{tpu_custom_call.1} parent=47 // pred_check_branch
          %812 = sbr.rel (%p810) target = $region52
        $region51: #{tpu_custom_call.1} parent=47 // pred_region
          %s813 = smul.u32 2, %s26
          %s815 = ssub.s32 128, 128
          %816 = vsyncadd %s806, %s815
          %s817 = smul.addr %s25, 2
          %s818 = sadd.s32 %s813, %s817
          %s819 = smul.addr %s818, 64
          %s820 = scalar_lea.hbm %s7, %s819
          %s822 = sshll.u32 %s809, 4
          %s823 = int_to_ptr.vmem [resolvable:$true] %s822
          %825 = dma.vmem_to_hbm [thread:$0]  %s823, 128, %s820, %s806
        $region52: #{tpu_custom_call.1} parent=47 // pred_fallthru
          _
      $region48: #{tpu_custom_call.1} parent=5 // pred_fallthru
        _
      %p826 = scmp.le.s32.totalorder 2, %s16
      // Predicated region
      $region53: #{tpu_custom_call.1} parent=5 // pred_check
        %p827 = pneg %p826
      $region54: #{tpu_custom_call.1} parent=5 // pred_check_branch
        %829 = sbr.rel (%p827) target = $region56
      $region55: #{tpu_custom_call.1} parent=5 // pred_region
        %s830 = ssub.s32 %s16, 2
        // Predicated region
        $region57: #{tpu_custom_call.1} parent=55 // pred_check
          %p831 = pneg %p234
        $region58: #{tpu_custom_call.1} parent=55 // pred_check_branch
          %833 = sbr.rel (%p831) target = $region60
        $region59: #{tpu_custom_call.1} parent=55 // pred_region
          %s834 = sand.u32 %s219, 1
          %s835 = scalar_lea.sflag [#allocation3], %s834
          %s836 = sand.u32 %s219, 1
          %s837 = smul.addr %s836, 8
          %s838 = scalar_lea.vmem [#allocation2], %s837
          %839 = dma.done %s835, 128
        $region60: #{tpu_custom_call.1} parent=55 // pred_fallthru
          _
      $region56: #{tpu_custom_call.1} parent=5 // pred_fallthru
        _
    $region6: #{tpu_custom_call.1} parent=1 // loop_footer
      %s20 = sadd.s32 1, %s16
    $region7: #{tpu_custom_call.1} parent=1 // loop_footer_branch
      %15 = sbr.rel target = $region3
    $region8: #{tpu_custom_call.1} parent=1 // loop_exit
      _
    %840 = vsyncpa [#allocation3], 1
    %s841 = scalar_lea.sflag [#allocation3], 1
    %842 = vsyncpa %s841, 1

</llo_original>
